<compile_context>
chip_gen: v7x
topology: tpu7x:2x2x1
jax: 0.10.0
libtpu: 0.0.40
codegen_flags: <defaults>
</compile_context>

<pallas_src>
import jax
import jax.numpy as jnp
from jax.experimental import pallas as pl
from jax.experimental.pallas import tpu as pltpu


def _round_up(x, m):
    return ((x + m - 1) // m) * m


def actor_kernel(obs_ref, w1_ref, b1_ref, w2_ref, b2_ref, w3_ref, b3_ref,
                 probs_ref):
    n_actions = probs_ref.shape[-1]       # static
    x = obs_ref[...]                      # (tb, obs_dim), native width
    cdt = w1_ref.dtype                    # bf16 (or f32) MXU input dtype

    # fc1 + ReLU  (MXU in bf16, f32 accumulation; bias/ReLU in f32)
    h1 = jnp.dot(x.astype(cdt), w1_ref[...], preferred_element_type=jnp.float32)
    h1 = jnp.maximum(h1 + b1_ref[...], 0.0)

    # fc2 + ReLU
    h2 = jnp.dot(h1.astype(cdt), w2_ref[...], preferred_element_type=jnp.float32)
    h2 = jnp.maximum(h2 + b2_ref[...], 0.0)

    # fc3 logits, lane-padded to n_pad; padded lanes already carry -1e30 via b3,
    # so they contribute exactly zero probability mass (exp underflows to 0).
    logits = jnp.dot(h2.astype(cdt), w3_ref[...], preferred_element_type=jnp.float32)
    logits = logits + b3_ref[...]

    # Numerically-stable softmax along the action axis.  Exact divide on the (tb, 1)
    # denominator so each row sums to 1 (approx reciprocal would give ~1 +/- 1e-3).
    m = jnp.max(logits, axis=-1, keepdims=True)
    e = jnp.exp(logits - m)
    denom = jnp.sum(e, axis=-1, keepdims=True)
    inv = 1.0 / denom
    probs = e * inv

    # Store only the real action lanes (narrow, but the store slot has huge slack here
    # and HBM writeback drops 16x versus a 128-wide slab).
    probs_ref[...] = probs[:, :n_actions].astype(probs_ref.dtype)


def init_params(key, obs_shape, n_actions, hidden=64, weight_dtype=jnp.bfloat16):
    """PyTorch-style nn.Linear init (+/- 1/sqrt(fan_in)), stored transposed (in, out).
    w1 keeps K = obs_shape (no lane padding of the obs read); hidden/action output dims
    are lane-padded; b3's padded lanes hold -1e30 (bakes the softmax mask into the bias).
    Weights are cast once to `weight_dtype`; biases stay f32."""
    h_pad = _round_up(hidden, 128)
    n_pad = _round_up(max(n_actions, 1), 128)
    ks = jax.random.split(key, 6)

    def linear(kw, kb, fan_in, fan_out, pad_in, pad_out, bias_pad=0.0):
        bound = 1.0 / float(fan_in) ** 0.5
        w = jax.random.uniform(kw, (fan_in, fan_out), jnp.float32, -bound, bound)
        b = jax.random.uniform(kb, (1, fan_out), jnp.float32, -bound, bound)
        w = jnp.pad(w, ((0, pad_in - fan_in), (0, pad_out - fan_out)))
        b = jnp.pad(b, ((0, 0), (0, pad_out - fan_out)), constant_values=bias_pad)
        return w.astype(weight_dtype), b

    w1, b1 = linear(ks[0], ks[1], obs_shape, hidden, obs_shape, h_pad)
    w2, b2 = linear(ks[2], ks[3], hidden, hidden, h_pad, h_pad)
    w3, b3 = linear(ks[4], ks[5], hidden, n_actions, h_pad, n_pad, bias_pad=-1e30)
    return {
        "w1": w1, "b1": b1, "w2": w2, "b2": b2, "w3": w3, "b3": b3,
        "obs_shape": obs_shape, "n_actions": n_actions,
        "h_pad": h_pad, "n_pad": n_pad,
    }


def actor_forward(obs, params, block_b=512):
    """obs: (B, obs_shape) -> probs (B, n_actions). Whole forward in one pallas_call."""
    B, obs_dim = obs.shape
    assert obs_dim == params["obs_shape"]
    h_pad, n_pad = params["h_pad"], params["n_pad"]
    n_actions = params["n_actions"]

    # Batch tile: multiple of 8 (f32 sublane).  Cap at ceil(B/2) (rounded to 8) so there
    # are >=2 grid tiles whenever possible and both v7x TensorCores get work; cap at 1024
    # so double-buffered tiles stay a couple of MB (far below scoped VMEM on all chips).
    b8 = _round_up(B, 8)
    two_tile_cap = max(8, _round_up((b8 + 1) // 2, 8))
    tb = max(8, min(_round_up(block_b, 8), 1024, two_tile_cap))
    b_padded = _round_up(B, tb)

    # Skip the pad copy entirely in the aligned common case.
    if b_padded == B:
        obs_p = obs
    else:
        obs_p = jnp.pad(obs, ((0, b_padded - B), (0, 0)))

    grid = (b_padded // tb,)

    flops = 2 * b_padded * (obs_dim * h_pad + h_pad * h_pad + h_pad * n_pad)
    param_bytes = sum(int(params[k].size) * int(params[k].dtype.itemsize)
                      for k in ("w1", "b1", "w2", "b2", "w3", "b3"))
    bytes_accessed = (int(obs_p.size) * int(obs_p.dtype.itemsize)
                      + b_padded * n_actions * 4 + param_bytes)

    probs_padded = pl.pallas_call(
        actor_kernel,
        out_shape=jax.ShapeDtypeStruct((b_padded, n_actions), jnp.float32),
        grid_spec=pltpu.PrefetchScalarGridSpec(
            num_scalar_prefetch=0,
            grid=grid,
            in_specs=[
                pl.BlockSpec((tb, obs_dim), lambda i: (i, 0)),      # obs tile, native width
                pl.BlockSpec((obs_dim, h_pad), lambda i: (0, 0)),   # w1 (VMEM-resident)
                pl.BlockSpec((1, h_pad), lambda i: (0, 0)),         # b1
                pl.BlockSpec((h_pad, h_pad), lambda i: (0, 0)),     # w2
                pl.BlockSpec((1, h_pad), lambda i: (0, 0)),         # b2
                pl.BlockSpec((h_pad, n_pad), lambda i: (0, 0)),     # w3
                pl.BlockSpec((1, n_pad), lambda i: (0, 0)),         # b3 (-1e30 pad lanes)
            ],
            out_specs=pl.BlockSpec((tb, n_actions), lambda i: (i, 0)),  # real-width output
        ),
        compiler_params=pltpu.CompilerParams(
            dimension_semantics=("parallel",),    # batch tiles split across TCs (v7x)
        ),
        cost_estimate=pl.CostEstimate(
            flops=int(flops),
            transcendentals=int(b_padded * n_pad),
            bytes_accessed=int(bytes_accessed),
        ),
    )(obs_p, params["w1"], params["b1"], params["w2"], params["b2"],
      params["w3"], params["b3"])

    if b_padded == B:
        return probs_padded
    return probs_padded[:B]   # drop meaningless padded-batch rows


def reference_forward(obs, params):
    """Pure-JAX reference mirroring the kernel numerics (same bf16 weights, f32 accum)."""
    n_actions = params["n_actions"]
    cdt = params["w1"].dtype
    h1 = jnp.maximum(
        jnp.dot(obs.astype(cdt), params["w1"], preferred_element_type=jnp.float32)
        + params["b1"], 0.0)
    h2 = jnp.maximum(
        jnp.dot(h1.astype(cdt), params["w2"], preferred_element_type=jnp.float32)
        + params["b2"], 0.0)
    logits = (jnp.dot(h2.astype(cdt), params["w3"], preferred_element_type=jnp.float32)
              + params["b3"])
    return jax.nn.softmax(logits[:, :n_actions], axis=-1)


if __name__ == "__main__":
    key = jax.random.PRNGKey(0)
    k_obs, k_params = jax.random.split(key)

    B = 64           # batch of observations (e.g. many parallel envs per step)
    OBS_SHAPE = 32   # args.obs_shape
    N_ACTIONS = 8    # args.n_actions

    obs = jax.random.normal(k_obs, (B, OBS_SHAPE), dtype=jnp.float32)
    params = init_params(k_params, OBS_SHAPE, N_ACTIONS)

    # With B=64 the two-tile cap gives tb=32 -> grid=(2,), exercising the batch grid
    # and the ("parallel",) megacore split.
    probs = actor_forward(obs, params)
    probs = jax.block_until_ready(probs)

    ref = reference_forward(obs, params)
    assert probs.shape == (B, N_ACTIONS)
    assert bool(jnp.all(jnp.isfinite(probs)))
    # bf16 MXU accumulation-order differences -> slightly loose tol vs XLA matmul
    assert jnp.allclose(probs, ref, atol=2e-3, rtol=2e-2), (
        float(jnp.max(jnp.abs(probs - ref))))
    # exact divide in the kernel -> rows sum to 1 at f32 precision
    assert jnp.allclose(jnp.sum(probs, axis=-1), 1.0, atol=1e-4)

    print("KERNEL_OK")
</pallas_src>

<mosaic_0001>
module attributes {stable_mosaic.version = 11 : i64} {
  func.func @actor_kernel(%arg0: i32, %arg1: memref<32x32xf32, #tpu.memory_space<vmem>>, %arg2: memref<32x128xbf16, #tpu.memory_space<vmem>>, %arg3: memref<1x128xf32, #tpu.memory_space<vmem>>, %arg4: memref<128x128xbf16, #tpu.memory_space<vmem>>, %arg5: memref<1x128xf32, #tpu.memory_space<vmem>>, %arg6: memref<128x128xbf16, #tpu.memory_space<vmem>>, %arg7: memref<1x128xf32, #tpu.memory_space<vmem>>, %arg8: memref<32x8xf32, #tpu.memory_space<vmem>>) attributes {dimension_semantics = [#tpu.dimension_semantics<parallel>], iteration_bounds = array<i64: 2>, scalar_prefetch = 0 : i64, scratch_operands = 0 : i64, tpu.core_type = #tpu.core_type<tc>, window_params = [{transform_indices = @transform_0, window_bounds = array<i64: 32, 32>}, {pipeline_mode = #tpu.pipeline_mode<synchronous>, transform_indices = @transform_1, window_bounds = array<i64: 32, 128>}, {pipeline_mode = #tpu.pipeline_mode<synchronous>, transform_indices = @transform_2, window_bounds = array<i64: 1, 128>}, {pipeline_mode = #tpu.pipeline_mode<synchronous>, transform_indices = @transform_3, window_bounds = array<i64: 128, 128>}, {pipeline_mode = #tpu.pipeline_mode<synchronous>, transform_indices = @transform_4, window_bounds = array<i64: 1, 128>}, {pipeline_mode = #tpu.pipeline_mode<synchronous>, transform_indices = @transform_5, window_bounds = array<i64: 128, 128>}, {pipeline_mode = #tpu.pipeline_mode<synchronous>, transform_indices = @transform_6, window_bounds = array<i64: 1, 128>}, {transform_indices = @transform_7, window_bounds = array<i64: 32, 8>}]} {
    %c0 = arith.constant 0 : index
    %c0_0 = arith.constant 0 : index
    %0 = vector.load %arg1[%c0, %c0_0] : memref<32x32xf32, #tpu.memory_space<vmem>>, vector<32x32xf32>
    %1 = arith.truncf %0 : vector<32x32xf32> to vector<32x32xbf16>
    %c0_1 = arith.constant 0 : index
    %c0_2 = arith.constant 0 : index
    %2 = vector.load %arg2[%c0_1, %c0_2] : memref<32x128xbf16, #tpu.memory_space<vmem>>, vector<32x128xbf16>
    %cst = arith.constant dense<0.000000e+00> : vector<32x128xf32>
    %3 = tpu.matmul %1, %2, %cst {dimension_numbers = #tpu.dot_dimension_numbers<[1], [0], [0], [1], [0, 0, 1, 1], [], []>} : vector<32x32xbf16>, vector<32x128xbf16>, vector<32x128xf32> -> vector<32x128xf32>
    %c0_3 = arith.constant 0 : index
    %c0_4 = arith.constant 0 : index
    %4 = vector.load %arg3[%c0_3, %c0_4] : memref<1x128xf32, #tpu.memory_space<vmem>>, vector<1x128xf32>
    %5 = vector.broadcast %4 : vector<1x128xf32> to vector<32x128xf32>
    %6 = arith.addf %3, %5 : vector<32x128xf32>
    %cst_5 = arith.constant 0.000000e+00 : f32
    %7 = vector.broadcast %cst_5 : f32 to vector<32x128xf32>
    %8 = arith.maximumf %6, %7 : vector<32x128xf32>
    %9 = arith.truncf %8 : vector<32x128xf32> to vector<32x128xbf16>
    %c0_6 = arith.constant 0 : index
    %c0_7 = arith.constant 0 : index
    %10 = vector.load %arg4[%c0_6, %c0_7] : memref<128x128xbf16, #tpu.memory_space<vmem>>, vector<128x128xbf16>
    %cst_8 = arith.constant dense<0.000000e+00> : vector<32x128xf32>
    %11 = tpu.matmul %9, %10, %cst_8 {dimension_numbers = #tpu.dot_dimension_numbers<[1], [0], [0], [1], [0, 0, 1, 1], [], []>} : vector<32x128xbf16>, vector<128x128xbf16>, vector<32x128xf32> -> vector<32x128xf32>
    %c0_9 = arith.constant 0 : index
    %c0_10 = arith.constant 0 : index
    %12 = vector.load %arg5[%c0_9, %c0_10] : memref<1x128xf32, #tpu.memory_space<vmem>>, vector<1x128xf32>
    %13 = vector.broadcast %12 : vector<1x128xf32> to vector<32x128xf32>
    %14 = arith.addf %11, %13 : vector<32x128xf32>
    %cst_11 = arith.constant 0.000000e+00 : f32
    %15 = vector.broadcast %cst_11 : f32 to vector<32x128xf32>
    %16 = arith.maximumf %14, %15 : vector<32x128xf32>
    %17 = arith.truncf %16 : vector<32x128xf32> to vector<32x128xbf16>
    %c0_12 = arith.constant 0 : index
    %c0_13 = arith.constant 0 : index
    %18 = vector.load %arg6[%c0_12, %c0_13] : memref<128x128xbf16, #tpu.memory_space<vmem>>, vector<128x128xbf16>
    %cst_14 = arith.constant dense<0.000000e+00> : vector<32x128xf32>
    %19 = tpu.matmul %17, %18, %cst_14 {dimension_numbers = #tpu.dot_dimension_numbers<[1], [0], [0], [1], [0, 0, 1, 1], [], []>} : vector<32x128xbf16>, vector<128x128xbf16>, vector<32x128xf32> -> vector<32x128xf32>
    %c0_15 = arith.constant 0 : index
    %c0_16 = arith.constant 0 : index
    %20 = vector.load %arg7[%c0_15, %c0_16] : memref<1x128xf32, #tpu.memory_space<vmem>>, vector<1x128xf32>
    %21 = vector.broadcast %20 : vector<1x128xf32> to vector<32x128xf32>
    %22 = arith.addf %19, %21 : vector<32x128xf32>
    %cst_17 = arith.constant dense<0xFF800000> : vector<32xf32>
    %23 = vector.multi_reduction <maximumf>, %22, %cst_17 [1] : vector<32x128xf32> to vector<32xf32>
    %24 = vector.shape_cast %23 : vector<32xf32> to vector<32x1xf32>
    %25 = vector.broadcast %24 : vector<32x1xf32> to vector<32x128xf32>
    %26 = arith.subf %22, %25 : vector<32x128xf32>
    %27 = math.exp %26 : vector<32x128xf32>
    %cst_18 = arith.constant dense<0.000000e+00> : vector<32xf32>
    %28 = vector.multi_reduction <add>, %27, %cst_18 [1] : vector<32x128xf32> to vector<32xf32>
    %29 = vector.shape_cast %28 : vector<32xf32> to vector<32x1xf32>
    %cst_19 = arith.constant 1.000000e+00 : f32
    %30 = vector.broadcast %cst_19 : f32 to vector<32x1xf32>
    %31 = arith.divf %30, %29 : vector<32x1xf32>
    %32 = vector.broadcast %31 : vector<32x1xf32> to vector<32x128xf32>
    %33 = arith.mulf %27, %32 : vector<32x128xf32>
    %34 = vector.extract_strided_slice %33 {offsets = [0, 0], sizes = [32, 8], strides = [1, 1]} : vector<32x128xf32> to vector<32x8xf32>
    %c0_20 = arith.constant 0 : index
    %c0_21 = arith.constant 0 : index
    %35 = vector.load %arg8[%c0_20, %c0_21] : memref<32x8xf32, #tpu.memory_space<vmem>>, vector<32x8xf32>
    tpu.vector_store %arg8[%c0_20, %c0_21], %34 {strides = array<i32>} : memref<32x8xf32, #tpu.memory_space<vmem>>, vector<32x8xf32>,
    return
  }
  func.func @transform_0(%arg0: i32) -> (i32, i32) {
    %c0_i32 = arith.constant 0 : i32
    %c0_i32_0 = arith.constant 0 : i32
    return %arg0, %c0_i32 : i32, i32
  }
  func.func @transform_1(%arg0: i32) -> (i32, i32) {
    %c0_i32 = arith.constant 0 : i32
    %c0_i32_0 = arith.constant 0 : i32
    %c0_i32_1 = arith.constant 0 : i32
    return %c0_i32, %c0_i32_0 : i32, i32
  }
  func.func @transform_2(%arg0: i32) -> (i32, i32) {
    %c0_i32 = arith.constant 0 : i32
    %c0_i32_0 = arith.constant 0 : i32
    %c0_i32_1 = arith.constant 0 : i32
    return %c0_i32, %c0_i32_0 : i32, i32
  }
  func.func @transform_3(%arg0: i32) -> (i32, i32) {
    %c0_i32 = arith.constant 0 : i32
    %c0_i32_0 = arith.constant 0 : i32
    %c0_i32_1 = arith.constant 0 : i32
    return %c0_i32, %c0_i32_0 : i32, i32
  }
  func.func @transform_4(%arg0: i32) -> (i32, i32) {
    %c0_i32 = arith.constant 0 : i32
    %c0_i32_0 = arith.constant 0 : i32
    %c0_i32_1 = arith.constant 0 : i32
    return %c0_i32, %c0_i32_0 : i32, i32
  }
  func.func @transform_5(%arg0: i32) -> (i32, i32) {
    %c0_i32 = arith.constant 0 : i32
    %c0_i32_0 = arith.constant 0 : i32
    %c0_i32_1 = arith.constant 0 : i32
    return %c0_i32, %c0_i32_0 : i32, i32
  }
  func.func @transform_6(%arg0: i32) -> (i32, i32) {
    %c0_i32 = arith.constant 0 : i32
    %c0_i32_0 = arith.constant 0 : i32
    %c0_i32_1 = arith.constant 0 : i32
    return %c0_i32, %c0_i32_0 : i32, i32
  }
  func.func @transform_7(%arg0: i32) -> (i32, i32) {
    %c0_i32 = arith.constant 0 : i32
    %c0_i32_0 = arith.constant 0 : i32
    return %arg0, %c0_i32 : i32, i32
  }
}

</mosaic_0001>

<llo_original>
// kernel: tpu_custom_call.1
$region0: #{tpu_custom_call.1}
  #allocation0 [shape = 'u32[]', space=smem, size = 0x4, offset = 0x4, fixed_abs, tag = 'smem constant byte address 0x4 - core index']
  #allocation1 [shape = 'u32[144,128]{1,0:T(1,128)}', space=vmem, size = 0x12000, scoped, tag = 'internal scratch']
  %s0 = inlined_call_operand.vmem [shape: f32[64,32], index: 0, kind: input, shape index: {}]
  %s1 = inlined_call_operand.vmem [shape: bf16[32,128], index: 1, kind: input, shape index: {}]
  %s2 = inlined_call_operand.vmem [shape: f32[1,128], index: 2, kind: input, shape index: {}]
  %s3 = inlined_call_operand.vmem [shape: bf16[128,128], index: 3, kind: input, shape index: {}]
  %s4 = inlined_call_operand.vmem [shape: f32[1,128], index: 4, kind: input, shape index: {}]
  %s5 = inlined_call_operand.hbm [shape: bf16[128,128], index: 5, kind: input, shape index: {}]
  %s6 = inlined_call_operand.vmem [shape: f32[1,128], index: 6, kind: input, shape index: {}]
  %s7 = inlined_call_operand.vmem [shape: f32[64,8], index: 7, kind: output, shape index: {}]
  %s8 = sld [smem:[#allocation0]]
  $region65: #{tpu_custom_call.1} parent=0
    _
  %s10 = ssub.s32 1, %s8
  %s11 = scalar_select 0, %s10, %s8
  $region1: #{tpu_custom_call.1} parent=0
    #allocation2 [shape = 'u8[32768]{0}', space=vmem, size = 0x8000, scoped, tag = 'input window, operand 5, single buffered']
    #allocation3 [shape = 's32[2]{0}', space=sflag, size = 0x8, scoped, tag = 'scoped memory for tpu_custom_call.1']
    %12 = vsyncpa [#allocation3], 0
    loop: start=0, step=1, limit=4
    $region2: #{tpu_custom_call.1} parent=1 // loop_pre_header
      _
    $region3: #{tpu_custom_call.1} parent=1 // loop_header
      %s14 = sphi 0, %s18
      %p15 = scmp.ge.s32.totalorder %s14, 4
      %s24 = sphi 0, %s26
      %s27 = sphi 0, %s24
      %s28 = sphi 0, %s27
      %s44 = sphi 0, %s28
      %s48 = sphi 0, %s48
      %s50 = sphi 0, %s48
      %s51 = sphi 0, %s50
      %s65 = sphi 0, %s51
      %s69 = sphi 0, %s69
      %s71 = sphi 0, %s69
      %s72 = sphi 0, %s71
      %s86 = sphi 0, %s72
      %s90 = sphi 0, %s90
      %s92 = sphi 0, %s90
      %s93 = sphi 0, %s92
      %s107 = sphi 0, %s93
      %s111 = sphi 0, %s111
      %s113 = sphi 0, %s111
      %s114 = sphi 0, %s113
      %s128 = sphi 0, %s114
      %s132 = sphi 0, %s132
      %s134 = sphi 0, %s132
      %s135 = sphi 0, %s134
      %s149 = sphi 0, %s135
      %s153 = sphi 0, %s153
      %s155 = sphi 0, %s153
      %s156 = sphi 0, %s155
      %s170 = sphi 0, %s156
      %s176 = sphi 0, %s178
      %s179 = sphi 0, %s176
      %s180 = sphi 0, %s179
      %s196 = sphi 0, %s180
    $region4: #{tpu_custom_call.1} parent=1 // loop_header_branch
      %17 = sbr.rel (%p15) target = $region8
    $region5: #{tpu_custom_call.1} parent=1 // loop_body
      %s19 = ssub.s32 %s14, 1
      %s20 = ssub.s32 %s14, 2
      %s21 = sadd.s32 %s14, 1
      %s22 = ssub.s32 %s14, %s21
      %p23 = scmp.eq.s32.totalorder %s22, 0
      %s25 = sadd.s32 %s24, 1
      %s26 = scalar_select %p23, %s24, %s25
      %p29 = pneg %p23
      %p30 = scmp.eq.s32.totalorder %s14, 1
      %p31 = por %p29, %p30
      %p32 = scmp.ne.s32.totalorder %s24, %s27
      %p33 = scmp.eq.s32.totalorder %s14, 0
      %p34 = por %p32, %p33
      %p35 = scmp.ne.s32.totalorder %s24, %s27
      %p36 = scmp.eq.s32.totalorder %s19, 1
      %p37 = por %p35, %p36
      %p38 = scmp.ne.s32.totalorder %s27, %s28
      %p39 = scmp.eq.s32.totalorder %s19, 0
      %p40 = por %p38, %p39
      %p41 = scmp.ne.s32.totalorder %s27, %s28
      %p42 = scmp.eq.s32.totalorder %s20, 1
      %p43 = por %p41, %p42
      %p45 = scmp.ne.s32.totalorder %s28, %s44
      %p46 = scmp.eq.s32.totalorder %s20, 0
      %p47 = por %p45, %p46
      %s49 = sadd.s32 %s48, 1
      %p52 = scmp.eq.s32.totalorder %s14, 1
      %p53 = scmp.ne.s32.totalorder %s48, %s50
      %p54 = scmp.eq.s32.totalorder %s14, 0
      %p55 = por %p53, %p54
      %p56 = scmp.ne.s32.totalorder %s48, %s50
      %p57 = scmp.eq.s32.totalorder %s19, 1
      %p58 = por %p56, %p57
      %p59 = scmp.ne.s32.totalorder %s50, %s51
      %p60 = scmp.eq.s32.totalorder %s19, 0
      %p61 = por %p59, %p60
      %p62 = scmp.ne.s32.totalorder %s50, %s51
      %p63 = scmp.eq.s32.totalorder %s20, 1
      %p64 = por %p62, %p63
      %p66 = scmp.ne.s32.totalorder %s51, %s65
      %p67 = scmp.eq.s32.totalorder %s20, 0
      %p68 = por %p66, %p67
      %s70 = sadd.s32 %s69, 1
      %p73 = scmp.eq.s32.totalorder %s14, 1
      %p74 = scmp.ne.s32.totalorder %s69, %s71
      %p75 = scmp.eq.s32.totalorder %s14, 0
      %p76 = por %p74, %p75
      %p77 = scmp.ne.s32.totalorder %s69, %s71
      %p78 = scmp.eq.s32.totalorder %s19, 1
      %p79 = por %p77, %p78
      %p80 = scmp.ne.s32.totalorder %s71, %s72
      %p81 = scmp.eq.s32.totalorder %s19, 0
      %p82 = por %p80, %p81
      %p83 = scmp.ne.s32.totalorder %s71, %s72
      %p84 = scmp.eq.s32.totalorder %s20, 1
      %p85 = por %p83, %p84
      %p87 = scmp.ne.s32.totalorder %s72, %s86
      %p88 = scmp.eq.s32.totalorder %s20, 0
      %p89 = por %p87, %p88
      %s91 = sadd.s32 %s90, 1
      %p94 = scmp.eq.s32.totalorder %s14, 1
      %p95 = scmp.ne.s32.totalorder %s90, %s92
      %p96 = scmp.eq.s32.totalorder %s14, 0
      %p97 = por %p95, %p96
      %p98 = scmp.ne.s32.totalorder %s90, %s92
      %p99 = scmp.eq.s32.totalorder %s19, 1
      %p100 = por %p98, %p99
      %p101 = scmp.ne.s32.totalorder %s92, %s93
      %p102 = scmp.eq.s32.totalorder %s19, 0
      %p103 = por %p101, %p102
      %p104 = scmp.ne.s32.totalorder %s92, %s93
      %p105 = scmp.eq.s32.totalorder %s20, 1
      %p106 = por %p104, %p105
      %p108 = scmp.ne.s32.totalorder %s93, %s107
      %p109 = scmp.eq.s32.totalorder %s20, 0
      %p110 = por %p108, %p109
      %s112 = sadd.s32 %s111, 1
      %p115 = scmp.eq.s32.totalorder %s14, 1
      %p116 = scmp.ne.s32.totalorder %s111, %s113
      %p117 = scmp.eq.s32.totalorder %s14, 0
      %p118 = por %p116, %p117
      %p119 = scmp.ne.s32.totalorder %s111, %s113
      %p120 = scmp.eq.s32.totalorder %s19, 1
      %p121 = por %p119, %p120
      %p122 = scmp.ne.s32.totalorder %s113, %s114
      %p123 = scmp.eq.s32.totalorder %s19, 0
      %p124 = por %p122, %p123
      %p125 = scmp.ne.s32.totalorder %s113, %s114
      %p126 = scmp.eq.s32.totalorder %s20, 1
      %p127 = por %p125, %p126
      %p129 = scmp.ne.s32.totalorder %s114, %s128
      %p130 = scmp.eq.s32.totalorder %s20, 0
      %p131 = por %p129, %p130
      %s133 = sadd.s32 %s132, 1
      %p136 = scmp.eq.s32.totalorder %s14, 1
      %p137 = scmp.ne.s32.totalorder %s132, %s134
      %p138 = scmp.eq.s32.totalorder %s14, 0
      %p139 = por %p137, %p138
      %p140 = scmp.ne.s32.totalorder %s132, %s134
      %p141 = scmp.eq.s32.totalorder %s19, 1
      %p142 = por %p140, %p141
      %p143 = scmp.ne.s32.totalorder %s134, %s135
      %p144 = scmp.eq.s32.totalorder %s19, 0
      %p145 = por %p143, %p144
      %p146 = scmp.ne.s32.totalorder %s134, %s135
      %p147 = scmp.eq.s32.totalorder %s20, 1
      %p148 = por %p146, %p147
      %p150 = scmp.ne.s32.totalorder %s135, %s149
      %p151 = scmp.eq.s32.totalorder %s20, 0
      %p152 = por %p150, %p151
      %s154 = sadd.s32 %s153, 1
      %p157 = scmp.eq.s32.totalorder %s14, 1
      %p158 = scmp.ne.s32.totalorder %s153, %s155
      %p159 = scmp.eq.s32.totalorder %s14, 0
      %p160 = por %p158, %p159
      %p161 = scmp.ne.s32.totalorder %s153, %s155
      %p162 = scmp.eq.s32.totalorder %s19, 1
      %p163 = por %p161, %p162
      %p164 = scmp.ne.s32.totalorder %s155, %s156
      %p165 = scmp.eq.s32.totalorder %s19, 0
      %p166 = por %p164, %p165
      %p167 = scmp.ne.s32.totalorder %s155, %s156
      %p168 = scmp.eq.s32.totalorder %s20, 1
      %p169 = por %p167, %p168
      %p171 = scmp.ne.s32.totalorder %s156, %s170
      %p172 = scmp.eq.s32.totalorder %s20, 0
      %p173 = por %p171, %p172
      %s174 = ssub.s32 %s14, %s21
      %p175 = scmp.eq.s32.totalorder %s174, 0
      %s177 = sadd.s32 %s176, 1
      %s178 = scalar_select %p175, %s176, %s177
      %p181 = pneg %p175
      %p182 = scmp.eq.s32.totalorder %s14, 1
      %p183 = por %p181, %p182
      %p184 = scmp.ne.s32.totalorder %s176, %s179
      %p185 = scmp.eq.s32.totalorder %s14, 0
      %p186 = por %p184, %p185
      %p187 = scmp.ne.s32.totalorder %s176, %s179
      %p188 = scmp.eq.s32.totalorder %s19, 1
      %p189 = por %p187, %p188
      %p190 = scmp.ne.s32.totalorder %s179, %s180
      %p191 = scmp.eq.s32.totalorder %s19, 0
      %p192 = por %p190, %p191
      %p193 = scmp.ne.s32.totalorder %s179, %s180
      %p194 = scmp.eq.s32.totalorder %s20, 1
      %p195 = por %p193, %p194
      %p197 = scmp.ne.s32.totalorder %s180, %s196
      %p198 = scmp.eq.s32.totalorder %s20, 0
      %p199 = por %p197, %p198
      %p200 = scmp.le.s32.totalorder 1, %s14
      %p201 = scmp.lt.s32.totalorder %s14, 3
      %p202 = pnand %p200, %p201
      %p203 = pneg %p202
      // Predicated region
      $region9: #{tpu_custom_call.1} parent=5 // pred_check
        _
      $region10: #{tpu_custom_call.1} parent=5 // pred_check_branch
        %205 = sbr.rel (%p202) target = $region12
      $region11: #{tpu_custom_call.1} parent=5 // pred_region
        %s206 = ssub.s32 %s14, 1
        // Predicated region
        $region13: #{tpu_custom_call.1} parent=11 // pred_check
          %p207 = pneg %p61
        $region14: #{tpu_custom_call.1} parent=11 // pred_check_branch
          %209 = sbr.rel (%p207) target = $region16
        $region15: #{tpu_custom_call.1} parent=11 // pred_region
          _
        $region16: #{tpu_custom_call.1} parent=11 // pred_fallthru
          _
        // Predicated region
        $region17: #{tpu_custom_call.1} parent=11 // pred_check
          %p210 = pneg %p82
        $region18: #{tpu_custom_call.1} parent=11 // pred_check_branch
          %212 = sbr.rel (%p210) target = $region20
        $region19: #{tpu_custom_call.1} parent=11 // pred_region
          _
        $region20: #{tpu_custom_call.1} parent=11 // pred_fallthru
          _
        // Predicated region
        $region21: #{tpu_custom_call.1} parent=11 // pred_check
          %p213 = pneg %p103
        $region22: #{tpu_custom_call.1} parent=11 // pred_check_branch
          %215 = sbr.rel (%p213) target = $region24
        $region23: #{tpu_custom_call.1} parent=11 // pred_region
          _
        $region24: #{tpu_custom_call.1} parent=11 // pred_fallthru
          _
        // Predicated region
        $region25: #{tpu_custom_call.1} parent=11 // pred_check
          %p216 = pneg %p124
        $region26: #{tpu_custom_call.1} parent=11 // pred_check_branch
          %218 = sbr.rel (%p216) target = $region28
        $region27: #{tpu_custom_call.1} parent=11 // pred_region
          _
        $region28: #{tpu_custom_call.1} parent=11 // pred_fallthru
          _
        // Predicated region
        $region29: #{tpu_custom_call.1} parent=11 // pred_check
          %p219 = pneg %p145
        $region30: #{tpu_custom_call.1} parent=11 // pred_check_branch
          %221 = sbr.rel (%p219) target = $region32
        $region31: #{tpu_custom_call.1} parent=11 // pred_region
          %s223 = ssub.s32 1024, 1024
          %224 = vsyncadd [#allocation3], %s223
          %s225 = sshll.u32 [#allocation2], 4
          %s226 = int_to_ptr.vmem [resolvable:$true] %s225
          %231 = dma.hbm_to_vmem [thread:$0]  %s5, 1024, %s226, [#allocation3], 64, 64, 4
        $region32: #{tpu_custom_call.1} parent=11 // pred_fallthru
          _
        // Predicated region
        $region33: #{tpu_custom_call.1} parent=11 // pred_check
          %p232 = pneg %p166
        $region34: #{tpu_custom_call.1} parent=11 // pred_check_branch
          %234 = sbr.rel (%p232) target = $region36
        $region35: #{tpu_custom_call.1} parent=11 // pred_region
          _
        $region36: #{tpu_custom_call.1} parent=11 // pred_fallthru
          _
      $region12: #{tpu_custom_call.1} parent=5 // pred_fallthru
        _
      %p235 = scmp.lt.s32.totalorder %s14, 2
      // Predicated region
      $region37: #{tpu_custom_call.1} parent=5 // pred_check
        %p236 = pneg %p235
      $region38: #{tpu_custom_call.1} parent=5 // pred_check_branch
        %238 = sbr.rel (%p236) target = $region40
      $region39: #{tpu_custom_call.1} parent=5 // pred_region
        // Predicated region
        $region41: #{tpu_custom_call.1} parent=39 // pred_check
          %p239 = pneg %p34
        $region42: #{tpu_custom_call.1} parent=39 // pred_check_branch
          %241 = sbr.rel (%p239) target = $region44
        $region43: #{tpu_custom_call.1} parent=39 // pred_region
          %s242 = smul.u32 4, %s14
          %p243 = scmp.lt.s32.totalorder %s242, 7
          %s244 = scalar_select %p243, %s242, 7
          %s245 = smul.addr %s244, 8
          %s246 = scalar_lea.vmem %s0, %s245
          %s247 = smul.u32 4, %s14
        $region44: #{tpu_custom_call.1} parent=39 // pred_fallthru
          _
      $region40: #{tpu_custom_call.1} parent=5 // pred_fallthru
        _
      %p248 = scmp.le.s32.totalorder 1, %s14
      %p249 = scmp.lt.s32.totalorder %s14, 3
      %p250 = pnand %p248, %p249
      %p251 = pneg %p250
      // Predicated region
      $region45: #{tpu_custom_call.1} parent=5 // pred_check
        _
      $region46: #{tpu_custom_call.1} parent=5 // pred_check_branch
        %253 = sbr.rel (%p250) target = $region48
      $region47: #{tpu_custom_call.1} parent=5 // pred_region
        %s254 = ssub.s32 %s14, 1
        // Predicated region
        $region49: #{tpu_custom_call.1} parent=47 // pred_check
          %p255 = pneg %p145
        $region50: #{tpu_custom_call.1} parent=47 // pred_check_branch
          %257 = sbr.rel (%p255) target = $region52
        $region51: #{tpu_custom_call.1} parent=47 // pred_region
          %258 = dma.done [#allocation3], 1024
        $region52: #{tpu_custom_call.1} parent=47 // pred_fallthru
          _
        %s259 = smul.u32 4, %s19
        %p260 = scmp.lt.s32.totalorder %s259, 7
        %s261 = scalar_select %p260, %s259, 7
        %s262 = smul.addr %s261, 8
        %s263 = scalar_lea.vmem %s0, %s262
        %p264 = pneg %p40
        %p265 = pneg %p37
        %p266 = pneg %p61
        %p267 = pneg %p58
        %p268 = pneg %p82
        %p269 = pneg %p79
        %p270 = pneg %p103
        %p271 = pneg %p100
        %p272 = pneg %p124
        %p273 = pneg %p121
        %p274 = pneg %p145
        %p275 = pneg %p142
        %p276 = pneg %p166
        %p277 = pneg %p163
        %p278 = pneg %p192
        %p279 = pneg %p189
        %s280 = smul.u32 4, %s19
        %p281 = scmp.lt.s32.totalorder %s280, 7
        %s282 = scalar_select %p281, %s280, 7
        %s283 = smul.addr %s282, 8
        %s284 = scalar_lea.vmem %s7, %s283
        %s285 = smul.u32 4, %s19
        %p286 = scmp.lt.s32.totalorder %s285, 7
        %s287 = scalar_select %p286, %s285, 7
        %s288 = smul.addr %s287, 8
        %s289 = scalar_lea.vmem %s0, %s288
        %s290 = smul.u32 4, %s19
        %s291 = smul.u32 4, %s19
        %p292 = scmp.lt.s32.totalorder %s291, 7
        %s293 = scalar_select %p292, %s291, 7
        %s294 = smul.addr %s293, 8
        %s295 = scalar_lea.vmem %s7, %s294
        %s296 = smul.u32 4, %s19
        %v298 = vld [vmem:[%s289] sm:$0xff]
        %v299 = vld [vmem:[%s289 + $0x8] sm:$0xff]
        %v300 = vld [vmem:[%s289 + $0x10] sm:$0xff]
        %v301 = vld [vmem:[%s289 + $0x18] sm:$0xff]
        %v302 = vpack.c.bf16 %v299, %v298
        %v303 = vpack.c.bf16 %v301, %v300
        %v304 = vld [vmem:[%s1] sm:$0xf]
        %v305 = vld [vmem:[%s1 + $0x4] sm:$0xf]
        %v306 = vld [vmem:[%s1 + $0x8] sm:$0xf]
        %v307 = vld [vmem:[%s1 + $0xc] sm:$0xf]
        %v308 = vld [vmem:[%s2] sm:$0x1]
        %v310 = vlaneseq
        %v311 = vshrl.u32 %v310, 7
        %v312 = vsub.s32 0, %v311
        %v313 = vrot.slane %v308, %v312
        %v319 = vunpack.c.l.b16 %v304
        %v320 = vunpack.c.l.b16 %v305
        %v321 = vunpack.c.l.b16 %v306
        %v322 = vunpack.c.l.b16 %v307
        %v323 = vpack.c.b16 %v320, %v319
        %v324 = vpack.c.b16 %v322, %v321
        %vm327 = vcmask 261120
        %v329 = vsel %vm327, %v302, 0
        %v332 = vsel %vm327, %v303, 0
        %334 = vmatprep.subr.bf16.mxu0 0
        %335 = vmatpush1.bf16.msra.mxu0 %v323
        %336 = vmatprep.subr.bf16.mxu0 0
        %337 = vmatpush1.bf16.msra.mxu0 %v324
        %338 = vmatprep.subr.bf16.mxu0 0
        %339 = vmatpush1.bf16.msra.mxu0 0
        %340 = vmatprep.subr.bf16.mxu0 0
        %341 = vmatpush1.bf16.msra.mxu0 0
        %342 = vmatprep.subr.bf16.mxu0 0
        %343 = vmatpush1.bf16.msra.mxu0 0
        %344 = vmatprep.subr.bf16.mxu0 0
        %345 = vmatpush1.bf16.msra.mxu0 0
        %346 = vmatprep.subr.bf16.mxu0 0
        %347 = vmatpush1.bf16.msra.mxu0 0
        %348 = vmatprep.subr.bf16.mxu0 0
        %349 = vmatpush1.bf16.msra.mxu0 0
        %350 = vmatprep.subr.bf16.mxu0 0
        %351 = vmatpush1.bf16.msra.mxu0 0
        %352 = vmatprep.subr.bf16.mxu0 0
        %353 = vmatpush1.bf16.msra.mxu0 0
        %354 = vmatprep.subr.bf16.mxu0 0
        %355 = vmatpush1.bf16.msra.mxu0 0
        %356 = vmatprep.subr.bf16.mxu0 0
        %357 = vmatpush1.bf16.msra.mxu0 0
        %358 = vmatprep.subr.bf16.mxu0 0
        %359 = vmatpush1.bf16.msra.mxu0 0
        %360 = vmatprep.subr.bf16.mxu0 0
        %361 = vmatpush1.bf16.msra.mxu0 0
        %362 = vmatprep.subr.bf16.mxu0 0
        %363 = vmatpush1.bf16.msra.mxu0 0
        %364 = vmatprep.subr.bf16.mxu0 0
        %365 = vmatpush1.bf16.msra.mxu0 0
        %366 = vmatprep.mubr.bf16.mxu0 0
        %367 = vmatmul.mubr.bf16.gmra.mrb[0].mxu0 %v329
        %v368 = vpop.f32.mrb[0].mxu0
        %v369 = vadd.f32 %v313, %v368
        %v370 = vpop.f32.mrb[0].mxu0
        %v371 = vpop.f32.mrb[0].mxu0
        %v372 = vadd.f32 %v313, %v371
        %v373 = vpop.f32.mrb[0].mxu0
        %374 = vmatprep.mubr.bf16.mxu0 0
        %375 = vmatmul.mubr.bf16.gmra.mrb[0].mxu0 %v332
        %v376 = vpop.f32.mrb[0].mxu0
        %v377 = vadd.f32 %v313, %v376
        %v378 = vpop.f32.mrb[0].mxu0
        %v379 = vpop.f32.mrb[0].mxu0
        %v380 = vadd.f32 %v313, %v379
        %v381 = vpop.f32.mrb[0].mxu0
        %382 = vdwg.mxu0
        %v383 = vmax.f32 %v369, 0.0
        %v384 = vmax.f32 %v372, 0.0
        %v385 = vmax.f32 %v377, 0.0
        %v386 = vmax.f32 %v380, 0.0
        %v387 = vpack.c.bf16 %v384, %v383
        %v388 = vpack.c.bf16 %v386, %v385
        %v389 = vld [vmem:[%s3] sm:$0xf]
        %v390 = vld [vmem:[%s3 + $0x4] sm:$0xf]
        %v391 = vld [vmem:[%s3 + $0x8] sm:$0xf]
        %v392 = vld [vmem:[%s3 + $0xc] sm:$0xf]
        %v393 = vld [vmem:[%s3 + $0x10] sm:$0xf]
        %v394 = vld [vmem:[%s3 + $0x14] sm:$0xf]
        %v395 = vld [vmem:[%s3 + $0x18] sm:$0xf]
        %v396 = vld [vmem:[%s3 + $0x1c] sm:$0xf]
        %v397 = vld [vmem:[%s3 + $0x20] sm:$0xf]
        %v398 = vld [vmem:[%s3 + $0x24] sm:$0xf]
        %v399 = vld [vmem:[%s3 + $0x28] sm:$0xf]
        %v400 = vld [vmem:[%s3 + $0x2c] sm:$0xf]
        %v401 = vld [vmem:[%s3 + $0x30] sm:$0xf]
        %v402 = vld [vmem:[%s3 + $0x34] sm:$0xf]
        %v403 = vld [vmem:[%s3 + $0x38] sm:$0xf]
        %v404 = vld [vmem:[%s3 + $0x3c] sm:$0xf]
        %v405 = vld [vmem:[%s4] sm:$0x1]
        %v407 = vlaneseq
        %v408 = vshrl.u32 %v407, 7
        %v409 = vsub.s32 0, %v408
        %v410 = vrot.slane %v405, %v409
        %v428 = vunpack.c.l.b16 %v389
        %v429 = vunpack.c.l.b16 %v390
        %v430 = vunpack.c.l.b16 %v391
        %v431 = vunpack.c.l.b16 %v392
        %v432 = vunpack.c.l.b16 %v393
        %v433 = vunpack.c.l.b16 %v394
        %v434 = vunpack.c.l.b16 %v395
        %v435 = vunpack.c.l.b16 %v396
        %v436 = vunpack.c.l.b16 %v397
        %v437 = vunpack.c.l.b16 %v398
        %v438 = vunpack.c.l.b16 %v399
        %v439 = vunpack.c.l.b16 %v400
        %v440 = vunpack.c.l.b16 %v401
        %v441 = vunpack.c.l.b16 %v402
        %v442 = vunpack.c.l.b16 %v403
        %v443 = vunpack.c.l.b16 %v404
        %v444 = vpack.c.b16 %v429, %v428
        %v445 = vpack.c.b16 %v431, %v430
        %v446 = vpack.c.b16 %v433, %v432
        %v447 = vpack.c.b16 %v435, %v434
        %v448 = vpack.c.b16 %v437, %v436
        %v449 = vpack.c.b16 %v439, %v438
        %v450 = vpack.c.b16 %v441, %v440
        %v451 = vpack.c.b16 %v443, %v442
        %460 = vmatprep.subr.bf16.mxu0 0
        %461 = vmatpush1.bf16.msra.mxu0 %v444
        %462 = vmatprep.subr.bf16.mxu0 0
        %463 = vmatpush1.bf16.msra.mxu0 %v445
        %464 = vmatprep.subr.bf16.mxu0 0
        %465 = vmatpush1.bf16.msra.mxu0 %v446
        %466 = vmatprep.subr.bf16.mxu0 0
        %467 = vmatpush1.bf16.msra.mxu0 %v447
        %468 = vmatprep.subr.bf16.mxu0 0
        %469 = vmatpush1.bf16.msra.mxu0 %v448
        %470 = vmatprep.subr.bf16.mxu0 0
        %471 = vmatpush1.bf16.msra.mxu0 %v449
        %472 = vmatprep.subr.bf16.mxu0 0
        %473 = vmatpush1.bf16.msra.mxu0 %v450
        %474 = vmatprep.subr.bf16.mxu0 0
        %475 = vmatpush1.bf16.msra.mxu0 %v451
        %476 = vmatprep.subr.bf16.mxu0 0
        %477 = vmatpush1.bf16.msra.mxu0 0
        %478 = vmatprep.subr.bf16.mxu0 0
        %479 = vmatpush1.bf16.msra.mxu0 0
        %480 = vmatprep.subr.bf16.mxu0 0
        %481 = vmatpush1.bf16.msra.mxu0 0
        %482 = vmatprep.subr.bf16.mxu0 0
        %483 = vmatpush1.bf16.msra.mxu0 0
        %484 = vmatprep.subr.bf16.mxu0 0
        %485 = vmatpush1.bf16.msra.mxu0 0
        %486 = vmatprep.subr.bf16.mxu0 0
        %487 = vmatpush1.bf16.msra.mxu0 0
        %488 = vmatprep.subr.bf16.mxu0 0
        %489 = vmatpush1.bf16.msra.mxu0 0
        %490 = vmatprep.subr.bf16.mxu0 0
        %491 = vmatpush1.bf16.msra.mxu0 0
        %492 = vmatprep.mubr.bf16.mxu0 0
        %493 = vmatmul.mubr.bf16.gmra.mrb[0].mxu0 %v387
        %v494 = vpop.f32.mrb[0].mxu0
        %v495 = vadd.f32 %v410, %v494
        %v496 = vpop.f32.mrb[0].mxu0
        %v497 = vpop.f32.mrb[0].mxu0
        %v498 = vadd.f32 %v410, %v497
        %v499 = vpop.f32.mrb[0].mxu0
        %500 = vmatprep.mubr.bf16.mxu0 0
        %501 = vmatmul.mubr.bf16.gmra.mrb[0].mxu0 %v388
        %v502 = vpop.f32.mrb[0].mxu0
        %v503 = vadd.f32 %v410, %v502
        %v504 = vpop.f32.mrb[0].mxu0
        %v505 = vpop.f32.mrb[0].mxu0
        %v506 = vadd.f32 %v410, %v505
        %v507 = vpop.f32.mrb[0].mxu0
        %508 = vdwg.mxu0
        %v509 = vmax.f32 %v495, 0.0
        %v510 = vmax.f32 %v498, 0.0
        %v511 = vmax.f32 %v503, 0.0
        %v512 = vmax.f32 %v506, 0.0
        %v513 = vpack.c.bf16 %v510, %v509
        %v514 = vpack.c.bf16 %v512, %v511
        %v515 = vld [vmem:[#allocation2] sm:$0xf]
        %v516 = vld [vmem:[#allocation2 + $0x4] sm:$0xf]
        %v517 = vld [vmem:[#allocation2 + $0x8] sm:$0xf]
        %v518 = vld [vmem:[#allocation2 + $0xc] sm:$0xf]
        %v519 = vld [vmem:[#allocation2 + $0x10] sm:$0xf]
        %v520 = vld [vmem:[#allocation2 + $0x14] sm:$0xf]
        %v521 = vld [vmem:[#allocation2 + $0x18] sm:$0xf]
        %v522 = vld [vmem:[#allocation2 + $0x1c] sm:$0xf]
        %v523 = vld [vmem:[#allocation2 + $0x20] sm:$0xf]
        %v524 = vld [vmem:[#allocation2 + $0x24] sm:$0xf]
        %v525 = vld [vmem:[#allocation2 + $0x28] sm:$0xf]
        %v526 = vld [vmem:[#allocation2 + $0x2c] sm:$0xf]
        %v527 = vld [vmem:[#allocation2 + $0x30] sm:$0xf]
        %v528 = vld [vmem:[#allocation2 + $0x34] sm:$0xf]
        %v529 = vld [vmem:[#allocation2 + $0x38] sm:$0xf]
        %v530 = vld [vmem:[#allocation2 + $0x3c] sm:$0xf]
        %v531 = vld [vmem:[%s6] sm:$0x1]
        %v533 = vlaneseq
        %v534 = vshrl.u32 %v533, 7
        %v535 = vsub.s32 0, %v534
        %v536 = vrot.slane %v531, %v535
        %v554 = vunpack.c.l.b16 %v515
        %v555 = vunpack.c.l.b16 %v516
        %v556 = vunpack.c.l.b16 %v517
        %v557 = vunpack.c.l.b16 %v518
        %v558 = vunpack.c.l.b16 %v519
        %v559 = vunpack.c.l.b16 %v520
        %v560 = vunpack.c.l.b16 %v521
        %v561 = vunpack.c.l.b16 %v522
        %v562 = vunpack.c.l.b16 %v523
        %v563 = vunpack.c.l.b16 %v524
        %v564 = vunpack.c.l.b16 %v525
        %v565 = vunpack.c.l.b16 %v526
        %v566 = vunpack.c.l.b16 %v527
        %v567 = vunpack.c.l.b16 %v528
        %v568 = vunpack.c.l.b16 %v529
        %v569 = vunpack.c.l.b16 %v530
        %v570 = vpack.c.b16 %v555, %v554
        %v571 = vpack.c.b16 %v557, %v556
        %v572 = vpack.c.b16 %v559, %v558
        %v573 = vpack.c.b16 %v561, %v560
        %v574 = vpack.c.b16 %v563, %v562
        %v575 = vpack.c.b16 %v565, %v564
        %v576 = vpack.c.b16 %v567, %v566
        %v577 = vpack.c.b16 %v569, %v568
        %586 = vmatprep.subr.bf16.mxu0 0
        %587 = vmatpush1.bf16.msra.mxu0 %v570
        %588 = vmatprep.subr.bf16.mxu0 0
        %589 = vmatpush1.bf16.msra.mxu0 %v571
        %590 = vmatprep.subr.bf16.mxu0 0
        %591 = vmatpush1.bf16.msra.mxu0 %v572
        %592 = vmatprep.subr.bf16.mxu0 0
        %593 = vmatpush1.bf16.msra.mxu0 %v573
        %594 = vmatprep.subr.bf16.mxu0 0
        %595 = vmatpush1.bf16.msra.mxu0 %v574
        %596 = vmatprep.subr.bf16.mxu0 0
        %597 = vmatpush1.bf16.msra.mxu0 %v575
        %598 = vmatprep.subr.bf16.mxu0 0
        %599 = vmatpush1.bf16.msra.mxu0 %v576
        %600 = vmatprep.subr.bf16.mxu0 0
        %601 = vmatpush1.bf16.msra.mxu0 %v577
        %602 = vmatprep.subr.bf16.mxu0 0
        %603 = vmatpush1.bf16.msra.mxu0 0
        %604 = vmatprep.subr.bf16.mxu0 0
        %605 = vmatpush1.bf16.msra.mxu0 0
        %606 = vmatprep.subr.bf16.mxu0 0
        %607 = vmatpush1.bf16.msra.mxu0 0
        %608 = vmatprep.subr.bf16.mxu0 0
        %609 = vmatpush1.bf16.msra.mxu0 0
        %610 = vmatprep.subr.bf16.mxu0 0
        %611 = vmatpush1.bf16.msra.mxu0 0
        %612 = vmatprep.subr.bf16.mxu0 0
        %613 = vmatpush1.bf16.msra.mxu0 0
        %614 = vmatprep.subr.bf16.mxu0 0
        %615 = vmatpush1.bf16.msra.mxu0 0
        %616 = vmatprep.subr.bf16.mxu0 0
        %617 = vmatpush1.bf16.msra.mxu0 0
        %618 = vmatprep.mubr.bf16.mxu0 0
        %619 = vmatmul.mubr.bf16.gmra.mrb[0].mxu0 %v513
        %v620 = vpop.f32.mrb[0].mxu0
        %v621 = vadd.f32 %v536, %v620
        %v622 = vpop.f32.mrb[0].mxu0
        %v623 = vpop.f32.mrb[0].mxu0
        %v624 = vadd.f32 %v536, %v623
        %v625 = vpop.f32.mrb[0].mxu0
        %626 = vmatprep.mubr.bf16.mxu0 0
        %627 = vmatmul.mubr.bf16.gmra.mrb[0].mxu0 %v514
        %v628 = vpop.f32.mrb[0].mxu0
        %v629 = vadd.f32 %v536, %v628
        %v630 = vpop.f32.mrb[0].mxu0
        %v631 = vpop.f32.mrb[0].mxu0
        %v632 = vadd.f32 %v536, %v631
        %v633 = vpop.f32.mrb[0].mxu0
        %634 = vdwg.mxu0
        %635 = vmax.xlane.f32.xlu0 %v621
        %v636 = vpop.xlane.xlu0 %635
        %637 = vmax.xlane.f32.xlu0 %v624
        %v638 = vpop.xlane.xlu0 %637
        %639 = vmax.xlane.f32.xlu0 %v629
        %v640 = vpop.xlane.xlu0 %639
        %641 = vmax.xlane.f32.xlu0 %v632
        %v642 = vpop.xlane.xlu0 %641
        %v643 = vsub.f32 %v621, %v636
        %v644 = vsub.f32 %v624, %v638
        %v645 = vsub.f32 %v629, %v640
        %v646 = vsub.f32 %v632, %v642
        %v647 = vmul.f32 %v643, 1.442695
        %v648 = vpow.pop %v647
        %v649 = vmul.f32 %v644, 1.442695
        %v650 = vpow.pop %v649
        %v651 = vmul.f32 %v645, 1.442695
        %v652 = vpow.pop %v651
        %v653 = vmul.f32 %v646, 1.442695
        %v654 = vpow.pop %v653
        %655 = vadd.xlane.f32.xlu0 %v648
        %v656 = vpop.xlane.xlu0 %655
        %657 = vadd.xlane.f32.xlu0 %v650
        %v658 = vpop.xlane.xlu0 %657
        %659 = vadd.xlane.f32.xlu0 %v652
        %v660 = vpop.xlane.xlu0 %659
        %661 = vadd.xlane.f32.xlu0 %v654
        %v662 = vpop.xlane.xlu0 %661
        %v663 = vrcp.pop %v656
        %v664 = vmul.f32 1.0, %v663
        %v665 = vrcp.pop %v658
        %v666 = vmul.f32 1.0, %v665
        %v667 = vrcp.pop %v660
        %v668 = vmul.f32 1.0, %v667
        %v669 = vrcp.pop %v662
        %v670 = vmul.f32 1.0, %v669
        %v671 = vmul.f32 %v648, %v664
        %v672 = vmul.f32 %v650, %v666
        %v673 = vmul.f32 %v652, %v668
        %v674 = vmul.f32 %v654, %v670
        %vm675 = vcmask 64512
        %676 = vst.msk [vmem:[%s295] sm:$0xff] %vm675, %v671
        %677 = vst.msk [vmem:[%s295 + $0x8] sm:$0xff] %vm675, %v672
        %678 = vst.msk [vmem:[%s295 + $0x10] sm:$0xff] %vm675, %v673
        %679 = vst.msk [vmem:[%s295 + $0x18] sm:$0xff] %vm675, %v674
        %s680 = smul.u32 4, %s19
        %p681 = scmp.lt.s32.totalorder %s680, 7
        %s682 = scalar_select %p681, %s680, 7
        %s683 = smul.addr %s682, 8
        %s684 = scalar_lea.vmem %s7, %s683
        // Predicated region
        $region53: #{tpu_custom_call.1} parent=47 // pred_check
          %p685 = pneg %p189
        $region54: #{tpu_custom_call.1} parent=47 // pred_check_branch
          %687 = sbr.rel (%p685) target = $region56
        $region55: #{tpu_custom_call.1} parent=47 // pred_region
          %s688 = smul.u32 4, %s19
        $region56: #{tpu_custom_call.1} parent=47 // pred_fallthru
          _
      $region48: #{tpu_custom_call.1} parent=5 // pred_fallthru
        _
      %p689 = scmp.le.s32.totalorder 2, %s14
      // Predicated region
      $region57: #{tpu_custom_call.1} parent=5 // pred_check
        %p690 = pneg %p689
      $region58: #{tpu_custom_call.1} parent=5 // pred_check_branch
        %692 = sbr.rel (%p690) target = $region60
      $region59: #{tpu_custom_call.1} parent=5 // pred_region
        %s693 = ssub.s32 %s14, 2
        // Predicated region
        $region61: #{tpu_custom_call.1} parent=59 // pred_check
          %p694 = pneg %p195
        $region62: #{tpu_custom_call.1} parent=59 // pred_check_branch
          %696 = sbr.rel (%p694) target = $region64
        $region63: #{tpu_custom_call.1} parent=59 // pred_region
          %s697 = smul.u32 4, %s20
          %p698 = scmp.lt.s32.totalorder %s697, 7
          %s699 = scalar_select %p698, %s697, 7
          %s700 = smul.addr %s699, 8
          %s701 = scalar_lea.vmem %s7, %s700
        $region64: #{tpu_custom_call.1} parent=59 // pred_fallthru
          _
      $region60: #{tpu_custom_call.1} parent=5 // pred_fallthru
        _
    $region6: #{tpu_custom_call.1} parent=1 // loop_footer
      %s18 = sadd.s32 1, %s14
    $region7: #{tpu_custom_call.1} parent=1 // loop_footer_branch
      %13 = sbr.rel target = $region3
    $region8: #{tpu_custom_call.1} parent=1 // loop_exit
      _
    %702 = vsyncpa [#allocation3], 1
    %s703 = scalar_lea.sflag [#allocation3], 1
    %704 = vsyncpa %s703, 1

</llo_original>
